<compile_context>
chip_gen: v6e
topology: v6e:2x2x1
jax: 0.10.0
libtpu: 0.0.40
codegen_flags: <defaults>
</compile_context>

<pallas_src>
import functools
import math

import jax
import jax.numpy as jnp
from jax.experimental import pallas as pl
from jax.experimental.pallas import tpu as pltpu

BN_EPS = 1e-5
LEAKY_SLOPE = 0.01                      # F.leaky_relu default
_VMEM_LIMIT = 32 * 1024 * 1024          # explicit scoped-VMEM budget (safe on v5e/v6e/v7x)


def _leaky_relu(x):
    return jnp.where(x > 0, x, LEAKY_SLOPE * x)


def _round_up(n, m):
    return ((n + m - 1) // m) * m


def _pad_to(a, shape):
    pads = [(0, t - s) for s, t in zip(a.shape, shape)]
    if all(p == (0, 0) for p in pads):
        return a
    return jnp.pad(a, pads)


# ---------------------------------------------------------------------------
# Pass 1: global BatchNorm statistics (per-feature sum and sum-of-squares),
# accumulated across batch tiles into resident output blocks.
# ---------------------------------------------------------------------------
def bn_stats_kernel(x_ref, sum_ref, sumsq_ref, *, true_batch, tile_b):
    i = pl.program_id(0)

    @pl.when(i == 0)
    def _():
        sum_ref[...] = jnp.zeros_like(sum_ref)
        sumsq_ref[...] = jnp.zeros_like(sumsq_ref)

    x = x_ref[...].astype(jnp.float32)
    if true_batch % tile_b != 0:
        # Mask out-of-range rows of the final (partial) batch tile.
        row = jax.lax.broadcasted_iota(jnp.int32, x.shape, 0) + i * tile_b
        x = jnp.where(row < true_batch, x, 0.0)

    sum_ref[...] += jnp.sum(x, axis=0, keepdims=True)
    sumsq_ref[...] += jnp.sum(x * x, axis=0, keepdims=True)


# ---------------------------------------------------------------------------
# Pass 2: (BN-folded) fc1 -> leaky_relu -> fc2 -> leaky_relu -> fc3 head.
# ---------------------------------------------------------------------------
def critic_mlp_kernel(x_ref, w1_ref, b1_ref, w2_ref, b2_ref, w3_ref, b3_ref, o_ref):
    # fc1 (BatchNorm already folded into w1/b1). Matmul inputs in w1's dtype (bf16 by
    # default) with f32 accumulation; bias add / activation in f32.
    x = x_ref[...].astype(w1_ref.dtype)
    h1 = jnp.dot(x, w1_ref[...], preferred_element_type=jnp.float32) + b1_ref[...]
    h1 = _leaky_relu(h1)

    # fc2
    h2 = jnp.dot(h1.astype(w2_ref.dtype), w2_ref[...],
                 preferred_element_type=jnp.float32) + b2_ref[...]
    h2 = _leaky_relu(h2)

    # fc3 head (single output unit): contract against the transposed activations so the
    # result is produced lane-dense as [1, tile_b] (batch on the lane axis).
    head = jnp.einsum("oh,bh->ob", w3_ref[...], h2.astype(w3_ref.dtype),
                      preferred_element_type=jnp.float32)
    o_ref[...] = (head + b3_ref[...]).astype(o_ref.dtype)


def critic_forward(x, params, *, tile_b=512, matmul_dtype=jnp.bfloat16):
    """x: [B, input_size] (or [input_size]) float. params: dict from init_params."""
    if x.ndim == 1:
        # TODO(synk): PyTorch BatchNorm1d errors for batch==1 in training mode; we mirror
        # the reference unsqueeze(0)/squeeze(0) path using batch statistics anyway.
        return critic_forward(x[None, :], params, tile_b=tile_b,
                              matmul_dtype=matmul_dtype)[0]

    x = x.astype(jnp.float32)
    B, F = x.shape

    # Batch tiling: one tile if it fits, otherwise 128-aligned tiles so the lane-dense
    # output blocks satisfy TPU lane constraints. (Per-tile VMEM stays small; on v7x the
    # "parallel" axis additionally splits tiles across the two TensorCores.)
    if B <= tile_b:
        tile_b = _round_up(B, 8)
        num_tiles = 1
    else:
        tile_b = _round_up(tile_b, 128)
        num_tiles = pl.cdiv(B, tile_b)

    # ---- Pass 1: BatchNorm statistics over the full batch (tiled reduction). ----
    s, sq = pl.pallas_call(
        functools.partial(bn_stats_kernel, true_batch=B, tile_b=tile_b),
        out_shape=(jax.ShapeDtypeStruct((1, F), jnp.float32),
                   jax.ShapeDtypeStruct((1, F), jnp.float32)),
        grid=(num_tiles,),
        in_specs=[pl.BlockSpec((tile_b, F), lambda i: (i, 0))],
        out_specs=(pl.BlockSpec((1, F), lambda i: (0, 0)),
                   pl.BlockSpec((1, F), lambda i: (0, 0))),
        compiler_params=pltpu.CompilerParams(
            dimension_semantics=("arbitrary",),
            vmem_limit_bytes=_VMEM_LIMIT),
    )(x)

    mean = s / B
    var = jnp.maximum(sq / B - mean * mean, 0.0)   # biased variance (training-mode BN)
    inv_std = jax.lax.rsqrt(var + BN_EPS)          # [1, F]

    # ---- Fold BN (gamma=1, beta=0) into fc1: tiny O(F*H1) one-off parameter transform. ----
    w1 = params["w1"].astype(jnp.float32)
    b1 = params["b1"].astype(jnp.float32)
    w1f = w1 * inv_std.reshape(-1, 1)
    b1f = b1 - (mean * inv_std) @ w1

    w2 = params["w2"].astype(jnp.float32)
    b2 = params["b2"].astype(jnp.float32)
    w3_row = params["w3"].astype(jnp.float32).reshape(1, -1)
    b3 = params["b3"].astype(jnp.float32).reshape(1, 1)

    # Pad hidden widths to multiples of 128 lanes (zero rows/cols are inert).
    H1 = _round_up(w1f.shape[1], 128)
    H2 = _round_up(w2.shape[1], 128)
    w1f = _pad_to(w1f, (F, H1))
    b1f = _pad_to(b1f, (1, H1))
    w2 = _pad_to(w2, (H1, H2))
    b2 = _pad_to(b2, (1, H2))
    w3_row = _pad_to(w3_row, (1, H2))

    w1k = w1f.astype(matmul_dtype)
    w2k = w2.astype(matmul_dtype)
    w3k = w3_row.astype(matmul_dtype)

    out_cols = num_tiles * tile_b      # lane-dense output slab; sliced back to (B, 1)

    out_row = pl.pallas_call(
        critic_mlp_kernel,
        out_shape=jax.ShapeDtypeStruct((1, out_cols), jnp.float32),
        grid=(num_tiles,),
        in_specs=[
            pl.BlockSpec((tile_b, F), lambda i: (i, 0)),   # x tile (streamed, double-buffered)
            pl.BlockSpec((F, H1), lambda i: (0, 0)),       # w1 (BN folded, resident)
            pl.BlockSpec((1, H1), lambda i: (0, 0)),       # b1 (BN folded)
            pl.BlockSpec((H1, H2), lambda i: (0, 0)),      # w2
            pl.BlockSpec((1, H2), lambda i: (0, 0)),       # b2
            pl.BlockSpec((1, H2), lambda i: (0, 0)),       # w3 row vector
            pl.BlockSpec((1, 1), lambda i: (0, 0)),        # b3
        ],
        out_specs=pl.BlockSpec((1, tile_b), lambda i: (0, i)),
        compiler_params=pltpu.CompilerParams(
            dimension_semantics=("parallel",),
            vmem_limit_bytes=_VMEM_LIMIT),
    )(x, w1k, b1f, w2k, b2, w3k, b3)

    return out_row[0, :B][:, None]


def init_params(key, input_size, fc_hidden_units=(256, 256)):
    """Deterministic synthetic init mirroring Critic.__init__ / reset_parameters.

    PyTorch stores Linear weights as [out, in]; we store them transposed ([in, out]).
    hidden_init in the reference uses weight.size()[0] (= out_features) as 'fan_in'.
    """
    h1, h2 = fc_hidden_units
    k1, k2, k3, k4, k5 = jax.random.split(key, 5)

    lim1 = 1.0 / math.sqrt(h1)        # hidden_init(fc1): size()[0] == out_features
    lim2 = 1.0 / math.sqrt(h2)
    # fc1/fc2 biases keep nn.Linear default init: U(-1/sqrt(in), 1/sqrt(in))
    blim1 = 1.0 / math.sqrt(input_size)
    blim2 = 1.0 / math.sqrt(h1)

    return {
        "w1": jax.random.uniform(k1, (input_size, h1), jnp.float32, -lim1, lim1),
        "b1": jax.random.uniform(k2, (1, h1), jnp.float32, -blim1, blim1),
        "w2": jax.random.uniform(k3, (h1, h2), jnp.float32, -lim2, lim2),
        "b2": jax.random.uniform(k4, (1, h2), jnp.float32, -blim2, blim2),
        "w3": jax.random.uniform(k5, (h2, 1), jnp.float32, -0.003, 0.003),
        "b3": jnp.full((1, 1), 1.0, jnp.float32),   # fc3.bias.data.fill_(1.0)
    }


def reference_forward(x, params):
    """Pure-JAX (f32, highest precision) reference for correctness checking."""
    hp = jax.lax.Precision.HIGHEST
    mean = jnp.mean(x, axis=0, keepdims=True)
    var = jnp.mean((x - mean) ** 2, axis=0, keepdims=True)
    xn = (x - mean) / jnp.sqrt(var + BN_EPS)
    h1 = _leaky_relu(jnp.dot(xn, params["w1"], precision=hp) + params["b1"])
    h2 = _leaky_relu(jnp.dot(h1, params["w2"], precision=hp) + params["b2"])
    return jnp.dot(h2, params["w3"], precision=hp) + params["b3"]


if __name__ == "__main__":
    key = jax.random.PRNGKey(0)
    kp, kx = jax.random.split(key)

    batch = 200                       # not a multiple of the tile -> exercises edge masking
    input_size = 16
    fc_hidden_units = (256, 256)      # module default

    params = init_params(kp, input_size, fc_hidden_units)
    # Non-standardized inputs so BatchNorm actually matters for the check.
    x = 2.0 * jax.random.normal(kx, (batch, input_size), jnp.float32) + 1.0

    ref = reference_forward(x, params)

    # f32 MXU path: tight correctness check (2 batch tiles + partial edge tile).
    out_f32 = jax.block_until_ready(
        critic_forward(x, params, tile_b=128, matmul_dtype=jnp.float32))
    assert out_f32.shape == (batch, 1), out_f32.shape
    err_f32 = float(jnp.max(jnp.abs(out_f32 - ref)))
    assert err_f32 < 2e-3, err_f32

    # bf16 MXU path (default fast path): looser tolerance for reduced-precision matmuls.
    out_bf16 = jax.block_until_ready(critic_forward(x, params, tile_b=128))
    err_bf16 = float(jnp.max(jnp.abs(out_bf16 - ref)))
    assert err_bf16 < 3e-2, err_bf16

    print("KERNEL_OK")
</pallas_src>

<mosaic_0001>
module attributes {stable_mosaic.version = 11 : i64} {
  func.func @bn_stats_kernel(%arg0: i32, %arg1: memref<128x16xf32, #tpu.memory_space<vmem>>, %arg2: memref<1x16xf32, #tpu.memory_space<vmem>>, %arg3: memref<1x16xf32, #tpu.memory_space<vmem>>) attributes {dimension_semantics = [#tpu.dimension_semantics<arbitrary>], iteration_bounds = array<i64: 2>, scalar_prefetch = 0 : i64, scratch_operands = 0 : i64, tpu.core_type = #tpu.core_type<tc>, window_params = [{transform_indices = @transform_0, window_bounds = array<i64: 128, 16>}, {pipeline_mode = #tpu.pipeline_mode<synchronous>, transform_indices = @transform_1, window_bounds = array<i64: 1, 16>}, {pipeline_mode = #tpu.pipeline_mode<synchronous>, transform_indices = @transform_2, window_bounds = array<i64: 1, 16>}]} {
    %c0_i32 = arith.constant 0 : i32
    %0 = arith.cmpi eq, %arg0, %c0_i32 : i32
    %1 = arith.extui %0 : i1 to i32
    %c0_i32_0 = arith.constant 0 : i32
    %2 = arith.cmpi ne, %1, %c0_i32_0 : i32
    scf.if %2 {
      %cst_12 = arith.constant 0.000000e+00 : f32
      %23 = vector.broadcast %cst_12 : f32 to vector<1x16xf32>
      %c0_13 = arith.constant 0 : index
      %c0_14 = arith.constant 0 : index
      %24 = vector.load %arg2[%c0_13, %c0_14] : memref<1x16xf32, #tpu.memory_space<vmem>>, vector<1x16xf32>
      tpu.vector_store %arg2[%c0_13, %c0_14], %23 {strides = array<i32>} : memref<1x16xf32, #tpu.memory_space<vmem>>, vector<1x16xf32>,
      %cst_15 = arith.constant 0.000000e+00 : f32
      %25 = vector.broadcast %cst_15 : f32 to vector<1x16xf32>
      %c0_16 = arith.constant 0 : index
      %c0_17 = arith.constant 0 : index
      %26 = vector.load %arg3[%c0_16, %c0_17] : memref<1x16xf32, #tpu.memory_space<vmem>>, vector<1x16xf32>
      tpu.vector_store %arg3[%c0_16, %c0_17], %25 {strides = array<i32>} : memref<1x16xf32, #tpu.memory_space<vmem>>, vector<1x16xf32>,
    } else {
    }
    %c0 = arith.constant 0 : index
    %c0_1 = arith.constant 0 : index
    %3 = vector.load %arg1[%c0, %c0_1] : memref<128x16xf32, #tpu.memory_space<vmem>>, vector<128x16xf32>
    %4 = tpu.iota {dimensions = array<i32: 0>} : vector<128x16xi32>
    %c128_i32 = arith.constant 128 : i32
    %5 = arith.muli %arg0, %c128_i32 : i32
    %6 = vector.broadcast %5 : i32 to vector<128x16xi32>
    %7 = arith.addi %4, %6 : vector<128x16xi32>
    %c200_i32 = arith.constant 200 : i32
    %8 = vector.broadcast %c200_i32 : i32 to vector<128x16xi32>
    %9 = arith.cmpi slt, %7, %8 : vector<128x16xi32>
    %cst = arith.constant 0.000000e+00 : f32
    %10 = vector.broadcast %cst : f32 to vector<128x16xf32>
    %11 = arith.select %9, %3, %10 : vector<128x16xi1>, vector<128x16xf32>
    %c0_2 = arith.constant 0 : index
    %c0_3 = arith.constant 0 : index
    %12 = vector.load %arg2[%c0_2, %c0_3] : memref<1x16xf32, #tpu.memory_space<vmem>>, vector<1x16xf32>
    %cst_4 = arith.constant dense<0.000000e+00> : vector<16xf32>
    %13 = vector.multi_reduction <add>, %11, %cst_4 [0] : vector<128x16xf32> to vector<16xf32>
    %14 = vector.shape_cast %13 : vector<16xf32> to vector<1x16xf32>
    %15 = arith.addf %12, %14 : vector<1x16xf32>
    %c0_5 = arith.constant 0 : index
    %c0_6 = arith.constant 0 : index
    %16 = vector.load %arg2[%c0_5, %c0_6] : memref<1x16xf32, #tpu.memory_space<vmem>>, vector<1x16xf32>
    tpu.vector_store %arg2[%c0_5, %c0_6], %15 {strides = array<i32>} : memref<1x16xf32, #tpu.memory_space<vmem>>, vector<1x16xf32>,
    %c0_7 = arith.constant 0 : index
    %c0_8 = arith.constant 0 : index
    %17 = vector.load %arg3[%c0_7, %c0_8] : memref<1x16xf32, #tpu.memory_space<vmem>>, vector<1x16xf32>
    %18 = arith.mulf %11, %11 : vector<128x16xf32>
    %cst_9 = arith.constant dense<0.000000e+00> : vector<16xf32>
    %19 = vector.multi_reduction <add>, %18, %cst_9 [0] : vector<128x16xf32> to vector<16xf32>
    %20 = vector.shape_cast %19 : vector<16xf32> to vector<1x16xf32>
    %21 = arith.addf %17, %20 : vector<1x16xf32>
    %c0_10 = arith.constant 0 : index
    %c0_11 = arith.constant 0 : index
    %22 = vector.load %arg3[%c0_10, %c0_11] : memref<1x16xf32, #tpu.memory_space<vmem>>, vector<1x16xf32>
    tpu.vector_store %arg3[%c0_10, %c0_11], %21 {strides = array<i32>} : memref<1x16xf32, #tpu.memory_space<vmem>>, vector<1x16xf32>,
    return
  }
  func.func @transform_0(%arg0: i32) -> (i32, i32) {
    %c0_i32 = arith.constant 0 : i32
    %c0_i32_0 = arith.constant 0 : i32
    return %arg0, %c0_i32 : i32, i32
  }
  func.func @transform_1(%arg0: i32) -> (i32, i32) {
    %c0_i32 = arith.constant 0 : i32
    %c0_i32_0 = arith.constant 0 : i32
    %c0_i32_1 = arith.constant 0 : i32
    return %c0_i32, %c0_i32_0 : i32, i32
  }
  func.func @transform_2(%arg0: i32) -> (i32, i32) {
    %c0_i32 = arith.constant 0 : i32
    %c0_i32_0 = arith.constant 0 : i32
    %c0_i32_1 = arith.constant 0 : i32
    return %c0_i32, %c0_i32_0 : i32, i32
  }
}

</mosaic_0001>

<llo_original>
// kernel: tpu_custom_call.1
$region0: #{tpu_custom_call.1}
  #allocation0 [shape = 'u32[]', space=smem, size = 0x4, offset = 0x4, fixed_abs, tag = 'smem constant byte address 0x4 - core index']
  #allocation1 [shape = 'u32[144,128]{1,0:T(1,128)}', space=vmem, size = 0x12000, scoped, tag = 'internal scratch']
  %s0 = inlined_call_operand.vmem [shape: f32[200,16], index: 0, kind: input, shape index: {}]
  %s1 = inlined_call_operand.hbm [shape: f32[1,16], index: 1, kind: output, shape index: {0}]
  %s2 = inlined_call_operand.hbm [shape: f32[1,16], index: 2, kind: output, shape index: {1}]
  %3 = xla_tuple %s1, %s2
  %s4 = sld [smem:[#allocation0]]
  $region49: #{tpu_custom_call.1} parent=0
    _
  %s6 = ssub.s32 1, %s4
  %s7 = scalar_select 0, %s6, %s4
  $region1: #{tpu_custom_call.1} parent=0
    #allocation2 [shape = 'u8[512]{0}', space=vmem, size = 0x400, scoped, tag = 'output window, operand 0, single buffered']
    #allocation3 [shape = 's32[2]{0}', space=sflag, size = 0x8, scoped, tag = 'scoped memory for tpu_custom_call.1']
    #allocation4 [shape = 'u8[512]{0}', space=vmem, size = 0x400, scoped, tag = 'output window, operand 1, single buffered']
    #allocation5 [shape = 's32[1]{0}', space=sflag, size = 0x4, scoped, tag = 'scoped memory for tpu_custom_call.1']
    %8 = vsyncpa [#allocation3], 0
    %9 = vsyncpa [#allocation5], 0
    loop: start=0, step=1, limit=4
    $region2: #{tpu_custom_call.1} parent=1 // loop_pre_header
      _
    $region3: #{tpu_custom_call.1} parent=1 // loop_header
      %s11 = sphi 0, %s15
      %p12 = scmp.ge.s32.totalorder %s11, 4
      %s21 = sphi 0, %s23
      %s24 = sphi 0, %s21
      %s25 = sphi 0, %s24
      %s41 = sphi 0, %s25
      %s45 = sphi 0, %s45
      %s47 = sphi 0, %s45
      %s48 = sphi 0, %s47
      %s62 = sphi 0, %s48
      %s66 = sphi 0, %s66
      %s68 = sphi 0, %s66
      %s69 = sphi 0, %s68
      %s83 = sphi 0, %s69
    $region4: #{tpu_custom_call.1} parent=1 // loop_header_branch
      %14 = sbr.rel (%p12) target = $region8
    $region5: #{tpu_custom_call.1} parent=1 // loop_body
      %s16 = ssub.s32 %s11, 1
      %s17 = ssub.s32 %s11, 2
      %s18 = sadd.s32 %s11, 1
      %s19 = ssub.s32 %s11, %s18
      %p20 = scmp.eq.s32.totalorder %s19, 0
      %s22 = sadd.s32 %s21, 1
      %s23 = scalar_select %p20, %s21, %s22
      %p26 = pneg %p20
      %p27 = scmp.eq.s32.totalorder %s11, 1
      %p28 = por %p26, %p27
      %p29 = scmp.ne.s32.totalorder %s21, %s24
      %p30 = scmp.eq.s32.totalorder %s11, 0
      %p31 = por %p29, %p30
      %p32 = scmp.ne.s32.totalorder %s21, %s24
      %p33 = scmp.eq.s32.totalorder %s16, 1
      %p34 = por %p32, %p33
      %p35 = scmp.ne.s32.totalorder %s24, %s25
      %p36 = scmp.eq.s32.totalorder %s16, 0
      %p37 = por %p35, %p36
      %p38 = scmp.ne.s32.totalorder %s24, %s25
      %p39 = scmp.eq.s32.totalorder %s17, 1
      %p40 = por %p38, %p39
      %p42 = scmp.ne.s32.totalorder %s25, %s41
      %p43 = scmp.eq.s32.totalorder %s17, 0
      %p44 = por %p42, %p43
      %s46 = sadd.s32 %s45, 1
      %p49 = scmp.eq.s32.totalorder %s11, 1
      %p50 = scmp.ne.s32.totalorder %s45, %s47
      %p51 = scmp.eq.s32.totalorder %s11, 0
      %p52 = por %p50, %p51
      %p53 = scmp.ne.s32.totalorder %s45, %s47
      %p54 = scmp.eq.s32.totalorder %s16, 1
      %p55 = por %p53, %p54
      %p56 = scmp.ne.s32.totalorder %s47, %s48
      %p57 = scmp.eq.s32.totalorder %s16, 0
      %p58 = por %p56, %p57
      %p59 = scmp.ne.s32.totalorder %s47, %s48
      %p60 = scmp.eq.s32.totalorder %s17, 1
      %p61 = por %p59, %p60
      %p63 = scmp.ne.s32.totalorder %s48, %s62
      %p64 = scmp.eq.s32.totalorder %s17, 0
      %p65 = por %p63, %p64
      %s67 = sadd.s32 %s66, 1
      %p70 = scmp.eq.s32.totalorder %s11, 1
      %p71 = scmp.ne.s32.totalorder %s66, %s68
      %p72 = scmp.eq.s32.totalorder %s11, 0
      %p73 = por %p71, %p72
      %p74 = scmp.ne.s32.totalorder %s66, %s68
      %p75 = scmp.eq.s32.totalorder %s16, 1
      %p76 = por %p74, %p75
      %p77 = scmp.ne.s32.totalorder %s68, %s69
      %p78 = scmp.eq.s32.totalorder %s16, 0
      %p79 = por %p77, %p78
      %p80 = scmp.ne.s32.totalorder %s68, %s69
      %p81 = scmp.eq.s32.totalorder %s17, 1
      %p82 = por %p80, %p81
      %p84 = scmp.ne.s32.totalorder %s69, %s83
      %p85 = scmp.eq.s32.totalorder %s17, 0
      %p86 = por %p84, %p85
      %p87 = scmp.le.s32.totalorder 1, %s11
      %p88 = scmp.lt.s32.totalorder %s11, 3
      %p89 = pnand %p87, %p88
      %p90 = pneg %p89
      // Predicated region
      $region9: #{tpu_custom_call.1} parent=5 // pred_check
        _
      $region10: #{tpu_custom_call.1} parent=5 // pred_check_branch
        %92 = sbr.rel (%p89) target = $region12
      $region11: #{tpu_custom_call.1} parent=5 // pred_region
        %s93 = ssub.s32 %s11, 1
      $region12: #{tpu_custom_call.1} parent=5 // pred_fallthru
        _
      %p94 = scmp.lt.s32.totalorder %s11, 2
      // Predicated region
      $region13: #{tpu_custom_call.1} parent=5 // pred_check
        %p95 = pneg %p94
      $region14: #{tpu_custom_call.1} parent=5 // pred_check_branch
        %97 = sbr.rel (%p95) target = $region16
      $region15: #{tpu_custom_call.1} parent=5 // pred_region
        // Predicated region
        $region17: #{tpu_custom_call.1} parent=15 // pred_check
          %p98 = pneg %p31
        $region18: #{tpu_custom_call.1} parent=15 // pred_check_branch
          %100 = sbr.rel (%p98) target = $region20
        $region19: #{tpu_custom_call.1} parent=15 // pred_region
          %s101 = smul.u32 16, %s11
          %s102 = ssub.s32 25, %s101
          %p103 = scmp.lt.s32.totalorder %s102, 16
          %s104 = scalar_select %p103, %s102, 16
          %s105 = smul.u32 128, %s104
          %p106 = scmp.lt.s32.totalorder %s101, 24
          %s107 = scalar_select %p106, %s101, 24
          %s108 = smul.addr %s107, 8
          %s109 = scalar_lea.vmem %s0, %s108
          %s110 = smul.u32 16, %s11
          %s111 = ssub.s32 25, %s110
          %p112 = scmp.lt.s32.totalorder %s111, 16
          %s113 = scalar_select %p112, %s111, 16
          %s114 = smul.u32 128, %s113
        $region20: #{tpu_custom_call.1} parent=15 // pred_fallthru
          _
      $region16: #{tpu_custom_call.1} parent=5 // pred_fallthru
        _
      %p115 = scmp.le.s32.totalorder 1, %s11
      %p116 = scmp.lt.s32.totalorder %s11, 3
      %p117 = pnand %p115, %p116
      %p118 = pneg %p117
      // Predicated region
      $region21: #{tpu_custom_call.1} parent=5 // pred_check
        _
      $region22: #{tpu_custom_call.1} parent=5 // pred_check_branch
        %120 = sbr.rel (%p117) target = $region24
      $region23: #{tpu_custom_call.1} parent=5 // pred_region
        %s121 = ssub.s32 %s11, 1
        %s122 = smul.u32 16, %s16
        %s123 = ssub.s32 25, %s122
        %p124 = scmp.lt.s32.totalorder %s123, 16
        %s125 = scalar_select %p124, %s123, 16
        %s126 = smul.u32 128, %s125
        %p127 = scmp.lt.s32.totalorder %s122, 24
        %s128 = scalar_select %p127, %s122, 24
        %s129 = smul.addr %s128, 8
        %s130 = scalar_lea.vmem %s0, %s129
        %p131 = pneg %p37
        %p132 = pneg %p34
        %p133 = pneg %p58
        %p134 = pneg %p55
        %p135 = pneg %p79
        %p136 = pneg %p76
        %s137 = smul.u32 16, %s16
        %s138 = ssub.s32 25, %s137
        %p139 = scmp.lt.s32.totalorder %s138, 16
        %s140 = scalar_select %p139, %s138, 16
        %s141 = smul.u32 128, %s140
        %p142 = scmp.lt.s32.totalorder %s137, 24
        %s143 = scalar_select %p142, %s137, 24
        %s144 = smul.addr %s143, 8
        %s145 = scalar_lea.vmem %s0, %s144
        %s146 = smul.u32 16, %s16
        %s147 = ssub.s32 25, %s146
        %p148 = scmp.lt.s32.totalorder %s147, 16
        %s149 = scalar_select %p148, %s147, 16
        %s150 = smul.u32 128, %s149
        %p151 = scmp.eq.s32.totalorder %s16, 0
        // Predicated region
        $region25: #{tpu_custom_call.1} parent=23 // pred_check
          %p152 = pneg %p151
        $region26: #{tpu_custom_call.1} parent=23 // pred_check_branch
          %154 = sbr.rel (%p152) target = $region28
        $region27: #{tpu_custom_call.1} parent=23 // pred_region
          %vm155 = vcmask 122880
          %156 = vst.msk [vmem:[#allocation2] sm:$0x1] %vm155, 0.0
          %157 = vst.msk [vmem:[#allocation4] sm:$0x1] %vm155, 0.0
        $region28: #{tpu_custom_call.1} parent=23 // pred_fallthru
          _
        %v158 = vld [vmem:[%s145] sm:$0xff]
        %v159 = vld [vmem:[%s145 + $0x8] sm:$0xff]
        %v160 = vld [vmem:[%s145 + $0x10] sm:$0xff]
        %v161 = vld [vmem:[%s145 + $0x18] sm:$0xff]
        %v162 = vld [vmem:[%s145 + $0x20] sm:$0xff]
        %v163 = vld [vmem:[%s145 + $0x28] sm:$0xff]
        %v164 = vld [vmem:[%s145 + $0x30] sm:$0xff]
        %v165 = vld [vmem:[%s145 + $0x38] sm:$0xff]
        %v166 = vld [vmem:[%s145 + $0x40] sm:$0xff]
        %v167 = vld [vmem:[%s145 + $0x48] sm:$0xff]
        %v168 = vld [vmem:[%s145 + $0x50] sm:$0xff]
        %v169 = vld [vmem:[%s145 + $0x58] sm:$0xff]
        %v170 = vld [vmem:[%s145 + $0x60] sm:$0xff]
        %v171 = vld [vmem:[%s145 + $0x68] sm:$0xff]
        %v172 = vld [vmem:[%s145 + $0x70] sm:$0xff]
        %v173 = vld [vmem:[%s145 + $0x78] sm:$0xff]
        %v174 = vlaneseq
        %v175 = vshrl.u32 %v174, 7
        %v176 = vadd.s32 %v175, 8
        %v177 = vadd.s32 %v175, 16
        %v178 = vadd.s32 %v175, 24
        %v179 = vadd.s32 %v175, 32
        %v180 = vadd.s32 %v175, 40
        %v181 = vadd.s32 %v175, 48
        %v182 = vadd.s32 %v175, 56
        %v183 = vadd.s32 %v175, 64
        %v184 = vadd.s32 %v175, 72
        %v185 = vadd.s32 %v175, 80
        %v186 = vadd.s32 %v175, 88
        %v187 = vadd.s32 %v175, 96
        %v188 = vadd.s32 %v175, 104
        %v189 = vadd.s32 %v175, 112
        %v190 = vadd.s32 %v175, 120
        %s191 = smul.u32 %s16, 128
        %v192 = vstv %s191
        %v193 = vadd.s32 %v175, %v192
        %v194 = vadd.s32 %v176, %v192
        %v195 = vadd.s32 %v177, %v192
        %v196 = vadd.s32 %v178, %v192
        %v197 = vadd.s32 %v179, %v192
        %v198 = vadd.s32 %v180, %v192
        %v199 = vadd.s32 %v181, %v192
        %v200 = vadd.s32 %v182, %v192
        %v201 = vadd.s32 %v183, %v192
        %v202 = vadd.s32 %v184, %v192
        %v203 = vadd.s32 %v185, %v192
        %v204 = vadd.s32 %v186, %v192
        %v205 = vadd.s32 %v187, %v192
        %v206 = vadd.s32 %v188, %v192
        %v207 = vadd.s32 %v189, %v192
        %v208 = vadd.s32 %v190, %v192
        %vm209 = vcmp.lt.s32.totalorder %v193, 200
        %vm210 = vcmp.lt.s32.totalorder %v194, 200
        %vm211 = vcmp.lt.s32.totalorder %v195, 200
        %vm212 = vcmp.lt.s32.totalorder %v196, 200
        %vm213 = vcmp.lt.s32.totalorder %v197, 200
        %vm214 = vcmp.lt.s32.totalorder %v198, 200
        %vm215 = vcmp.lt.s32.totalorder %v199, 200
        %vm216 = vcmp.lt.s32.totalorder %v200, 200
        %vm217 = vcmp.lt.s32.totalorder %v201, 200
        %vm218 = vcmp.lt.s32.totalorder %v202, 200
        %vm219 = vcmp.lt.s32.totalorder %v203, 200
        %vm220 = vcmp.lt.s32.totalorder %v204, 200
        %vm221 = vcmp.lt.s32.totalorder %v205, 200
        %vm222 = vcmp.lt.s32.totalorder %v206, 200
        %vm223 = vcmp.lt.s32.totalorder %v207, 200
        %vm224 = vcmp.lt.s32.totalorder %v208, 200
        %v225 = vsel %vm209, %v158, 0.0
        %v226 = vsel %vm210, %v159, 0.0
        %v227 = vsel %vm211, %v160, 0.0
        %v228 = vsel %vm212, %v161, 0.0
        %v229 = vsel %vm213, %v162, 0.0
        %v230 = vsel %vm214, %v163, 0.0
        %v231 = vsel %vm215, %v164, 0.0
        %v232 = vsel %vm216, %v165, 0.0
        %v233 = vsel %vm217, %v166, 0.0
        %v234 = vsel %vm218, %v167, 0.0
        %v235 = vsel %vm219, %v168, 0.0
        %v236 = vsel %vm220, %v169, 0.0
        %v237 = vsel %vm221, %v170, 0.0
        %v238 = vsel %vm222, %v171, 0.0
        %v239 = vsel %vm223, %v172, 0.0
        %v240 = vsel %vm224, %v173, 0.0
        %v241 = vld [vmem:[#allocation2] sm:$0x1]
        %vm242 = vcmask 130048
        %v243 = vsel %vm242, %v225, 0.0
        %v244 = vsel %vm242, %v226, 0.0
        %v245 = vadd.f32 %v243, %v244
        %v246 = vsel %vm242, %v227, 0.0
        %v247 = vadd.f32 %v245, %v246
        %v248 = vsel %vm242, %v228, 0.0
        %v249 = vadd.f32 %v247, %v248
        %v250 = vsel %vm242, %v229, 0.0
        %v251 = vadd.f32 %v249, %v250
        %v252 = vsel %vm242, %v230, 0.0
        %v253 = vadd.f32 %v251, %v252
        %v254 = vsel %vm242, %v231, 0.0
        %v255 = vadd.f32 %v253, %v254
        %v256 = vsel %vm242, %v232, 0.0
        %v257 = vadd.f32 %v255, %v256
        %v258 = vsel %vm242, %v233, 0.0
        %v259 = vadd.f32 %v257, %v258
        %v260 = vsel %vm242, %v234, 0.0
        %v261 = vadd.f32 %v259, %v260
        %v262 = vsel %vm242, %v235, 0.0
        %v263 = vadd.f32 %v261, %v262
        %v264 = vsel %vm242, %v236, 0.0
        %v265 = vadd.f32 %v263, %v264
        %v266 = vsel %vm242, %v237, 0.0
        %v267 = vadd.f32 %v265, %v266
        %v268 = vsel %vm242, %v238, 0.0
        %v269 = vadd.f32 %v267, %v268
        %v270 = vsel %vm242, %v239, 0.0
        %v271 = vadd.f32 %v269, %v270
        %v272 = vsel %vm242, %v240, 0.0
        %v273 = vadd.f32 %v271, %v272
        %v274 = vrot.slane %v273, 4
        %v275 = vadd.f32 %v273, %v274
        %v276 = vrot.slane %v275, 2
        %v277 = vadd.f32 %v275, %v276
        %v278 = vrot.slane %v277, 1
        %v279 = vadd.f32 %v277, %v278
        %v280 = vadd.f32 %v241, %v279
        %vm281 = vcmask 122880
        %282 = vst.msk [vmem:[#allocation2] sm:$0x1] %vm281, %v280
        %v283 = vld [vmem:[#allocation4] sm:$0x1]
        %v284 = vmul.f32 %v225, %v225
        %v285 = vmul.f32 %v226, %v226
        %v286 = vmul.f32 %v227, %v227
        %v287 = vmul.f32 %v228, %v228
        %v288 = vmul.f32 %v229, %v229
        %v289 = vmul.f32 %v230, %v230
        %v290 = vmul.f32 %v231, %v231
        %v291 = vmul.f32 %v232, %v232
        %v292 = vmul.f32 %v233, %v233
        %v293 = vmul.f32 %v234, %v234
        %v294 = vmul.f32 %v235, %v235
        %v295 = vmul.f32 %v236, %v236
        %v296 = vmul.f32 %v237, %v237
        %v297 = vmul.f32 %v238, %v238
        %v298 = vmul.f32 %v239, %v239
        %v299 = vmul.f32 %v240, %v240
        %v300 = vsel %vm242, %v284, 0.0
        %v301 = vsel %vm242, %v285, 0.0
        %v302 = vadd.f32 %v300, %v301
        %v303 = vsel %vm242, %v286, 0.0
        %v304 = vadd.f32 %v302, %v303
        %v305 = vsel %vm242, %v287, 0.0
        %v306 = vadd.f32 %v304, %v305
        %v307 = vsel %vm242, %v288, 0.0
        %v308 = vadd.f32 %v306, %v307
        %v309 = vsel %vm242, %v289, 0.0
        %v310 = vadd.f32 %v308, %v309
        %v311 = vsel %vm242, %v290, 0.0
        %v312 = vadd.f32 %v310, %v311
        %v313 = vsel %vm242, %v291, 0.0
        %v314 = vadd.f32 %v312, %v313
        %v315 = vsel %vm242, %v292, 0.0
        %v316 = vadd.f32 %v314, %v315
        %v317 = vsel %vm242, %v293, 0.0
        %v318 = vadd.f32 %v316, %v317
        %v319 = vsel %vm242, %v294, 0.0
        %v320 = vadd.f32 %v318, %v319
        %v321 = vsel %vm242, %v295, 0.0
        %v322 = vadd.f32 %v320, %v321
        %v323 = vsel %vm242, %v296, 0.0
        %v324 = vadd.f32 %v322, %v323
        %v325 = vsel %vm242, %v297, 0.0
        %v326 = vadd.f32 %v324, %v325
        %v327 = vsel %vm242, %v298, 0.0
        %v328 = vadd.f32 %v326, %v327
        %v329 = vsel %vm242, %v299, 0.0
        %v330 = vadd.f32 %v328, %v329
        %v331 = vrot.slane %v330, 4
        %v332 = vadd.f32 %v330, %v331
        %v333 = vrot.slane %v332, 2
        %v334 = vadd.f32 %v332, %v333
        %v335 = vrot.slane %v334, 1
        %v336 = vadd.f32 %v334, %v335
        %v337 = vadd.f32 %v283, %v336
        %338 = vst.msk [vmem:[#allocation4] sm:$0x1] %vm281, %v337
        // Predicated region
        $region29: #{tpu_custom_call.1} parent=23 // pred_check
          %p339 = pneg %p55
        $region30: #{tpu_custom_call.1} parent=23 // pred_check_branch
          %341 = sbr.rel (%p339) target = $region32
        $region31: #{tpu_custom_call.1} parent=23 // pred_region
          %s343 = ssub.s32 16, 16
          %344 = vsyncadd [#allocation3], %s343
          %s346 = sshll.u32 [#allocation2], 4
          %s347 = int_to_ptr.vmem [resolvable:$true] %s346
          %349 = dma.vmem_to_hbm [thread:$0]  %s347, 16, %s1, [#allocation3]
        $region32: #{tpu_custom_call.1} parent=23 // pred_fallthru
          _
        // Predicated region
        $region33: #{tpu_custom_call.1} parent=23 // pred_check
          %p350 = pneg %p76
        $region34: #{tpu_custom_call.1} parent=23 // pred_check_branch
          %352 = sbr.rel (%p350) target = $region36
        $region35: #{tpu_custom_call.1} parent=23 // pred_region
          %s354 = ssub.s32 16, 16
          %355 = vsyncadd [#allocation5], %s354
          %s357 = sshll.u32 [#allocation4], 4
          %s358 = int_to_ptr.vmem [resolvable:$true] %s357
          %360 = dma.vmem_to_hbm [thread:$0]  %s358, 16, %s2, [#allocation5]
        $region36: #{tpu_custom_call.1} parent=23 // pred_fallthru
          _
        // Predicated region
        $region37: #{tpu_custom_call.1} parent=23 // pred_check
          %p361 = pneg %p55
        $region38: #{tpu_custom_call.1} parent=23 // pred_check_branch
          %363 = sbr.rel (%p361) target = $region40
        $region39: #{tpu_custom_call.1} parent=23 // pred_region
          %364 = dma.done [#allocation3], 16
        $region40: #{tpu_custom_call.1} parent=23 // pred_fallthru
          _
        // Predicated region
        $region41: #{tpu_custom_call.1} parent=23 // pred_check
          %p365 = pneg %p76
        $region42: #{tpu_custom_call.1} parent=23 // pred_check_branch
          %367 = sbr.rel (%p365) target = $region44
        $region43: #{tpu_custom_call.1} parent=23 // pred_region
          %368 = dma.done [#allocation5], 16
        $region44: #{tpu_custom_call.1} parent=23 // pred_fallthru
          _
      $region24: #{tpu_custom_call.1} parent=5 // pred_fallthru
        _
      %p369 = scmp.le.s32.totalorder 2, %s11
      // Predicated region
      $region45: #{tpu_custom_call.1} parent=5 // pred_check
        %p370 = pneg %p369
      $region46: #{tpu_custom_call.1} parent=5 // pred_check_branch
        %372 = sbr.rel (%p370) target = $region48
      $region47: #{tpu_custom_call.1} parent=5 // pred_region
        %s373 = ssub.s32 %s11, 2
      $region48: #{tpu_custom_call.1} parent=5 // pred_fallthru
        _
    $region6: #{tpu_custom_call.1} parent=1 // loop_footer
      %s15 = sadd.s32 1, %s11
    $region7: #{tpu_custom_call.1} parent=1 // loop_footer_branch
      %10 = sbr.rel target = $region3
    $region8: #{tpu_custom_call.1} parent=1 // loop_exit
      _
    %374 = vsyncpa [#allocation3], 1
    %s375 = scalar_lea.sflag [#allocation3], 1
    %376 = vsyncpa %s375, 1
    %377 = vsyncpa [#allocation5], 1

</llo_original>
